<compile_context>
chip_gen: v6e
topology: v6e:2x2x1
jax: 0.10.0
libtpu: 0.0.40
codegen_flags: <defaults>
</compile_context>

<pallas_src>
import functools

import jax
import jax.numpy as jnp
from jax import lax
from jax.experimental import pallas as pl
from jax.experimental.pallas import tpu as pltpu


def _attn_kernel(x_ref, wqkv_ref, wot_ref, o_ref, *, num_heads, kd, vd, scale):
    x = x_ref[0]                       # (S, H) in compute dtype
    S = x.shape[0]
    H = o_ref.shape[-1]
    cdt = x.dtype
    hd_k = kd // num_heads
    hd_v = vd // num_heads

    # Fused QKV projection for ALL heads: one MXU matmul, f32 accumulate.
    qkv = jnp.dot(x, wqkv_ref[...], preferred_element_type=jnp.float32)  # (S, 2kd+vd)

    # Causal additive bias (-1e9 above the diagonal), built once per batch tile.
    qi = lax.broadcasted_iota(jnp.int32, (S, S), 0)
    ki = lax.broadcasted_iota(jnp.int32, (S, S), 1)
    bias = jnp.where(ki > qi, jnp.float32(-1e9), jnp.float32(0.0))

    wot = wot_ref[...]                 # (vd, H) in compute dtype

    acc = jnp.zeros((S, H), jnp.float32)
    # num_heads is a small static constant -> fully unrolled Python loop.
    for h in range(num_heads):
        qh = qkv[:, h * hd_k:(h + 1) * hd_k].astype(cdt)                  # (S, hd_k)
        kh = qkv[:, kd + h * hd_k: kd + (h + 1) * hd_k].astype(cdt)       # (S, hd_k)
        vh = qkv[:, 2 * kd + h * hd_v: 2 * kd + (h + 1) * hd_v].astype(cdt)  # (S, hd_v)

        # logits[q_pos, k_pos] = sum_d q[q_pos, d] * k[k_pos, d]
        # (contract axis 1 of q with axis 1 of k -> no in-kernel transpose).
        logits = lax.dot_general(qh, kh, (((1,), (1,)), ((), ())),
                                 preferred_element_type=jnp.float32)      # (S, S)
        logits = logits * scale + bias

        # Softmax over the key axis (f32 math).
        m = jnp.max(logits, axis=-1, keepdims=True)
        e = jnp.exp(logits - m)
        w = e * pl.reciprocal(jnp.sum(e, axis=-1, keepdims=True), approx=True)

        attn_h = jnp.dot(w.astype(cdt), vh,
                         preferred_element_type=jnp.float32)              # (S, hd_v)

        # This head's contribution to the output projection:
        # out += attn_h @ Wo[:, h_slice].T == attn_h @ WoT[h_slice, :]
        acc = acc + jnp.dot(attn_h.astype(cdt),
                            wot[h * hd_v:(h + 1) * hd_v, :],
                            preferred_element_type=jnp.float32)

    o_ref[0] = acc.astype(o_ref.dtype)


def attn_forward(X, Wq, Wk, Wv, Wo, num_heads, compute_dtype=None):
    """Pallas equivalent of Attn.forward with attn_type='global'.

    X: [B, S, H]; Wq, Wk: [kd, H]; Wv: [vd, H]; Wo: [H, vd].
    compute_dtype: optional dtype (e.g. jnp.bfloat16) for the MXU matmul
    inputs; logits/softmax/accumulation stay in f32 and the output keeps
    X.dtype.
    """
    B, S, H = X.shape
    kd = Wq.shape[0]
    vd = Wv.shape[0]
    assert kd % num_heads == 0 and vd % num_heads == 0
    hd_k = kd // num_heads
    scale = float(hd_k) ** -0.5

    cdt = jnp.dtype(compute_dtype) if compute_dtype is not None else X.dtype
    Xc = jnp.asarray(X).astype(cdt)
    # Fused, pre-transposed weights (lane-dense RHS for the MXU).
    WqkvT = jnp.concatenate([jnp.asarray(Wq), jnp.asarray(Wk), jnp.asarray(Wv)],
                            axis=0).T.astype(cdt)        # [H, 2*kd+vd]
    WoT = jnp.asarray(Wo).T.astype(cdt)                  # [vd, H]

    kernel = functools.partial(_attn_kernel, num_heads=num_heads,
                               kd=kd, vd=vd, scale=scale)

    return pl.pallas_call(
        kernel,
        out_shape=jax.ShapeDtypeStruct((B, S, H), X.dtype),
        grid_spec=pltpu.PrefetchScalarGridSpec(
            num_scalar_prefetch=0,
            grid=(B,),
            in_specs=[
                pl.BlockSpec((1, S, H), lambda b: (b, 0, 0)),          # X
                pl.BlockSpec((H, 2 * kd + vd), lambda b: (0, 0)),      # fused QKV.T
                pl.BlockSpec((vd, H), lambda b: (0, 0)),               # Wo.T
            ],
            out_specs=pl.BlockSpec((1, S, H), lambda b: (b, 0, 0)),
        ),
        compiler_params=pltpu.CompilerParams(
            dimension_semantics=("parallel",)),
    )(Xc, WqkvT, WoT)


def attn_reference(X, Wq, Wk, Wv, Wo, num_heads):
    """Pure-JAX reference matching the PyTorch forward (attn_type='global')."""
    B, S, H = X.shape
    kd, vd = Wq.shape[0], Wv.shape[0]
    hd_k, hd_v = kd // num_heads, vd // num_heads
    q = X @ Wq.T
    k = X @ Wk.T
    v = X @ Wv.T
    split = lambda t, hd: t.reshape(B, S, num_heads, hd).transpose(0, 2, 1, 3)
    q = split(q, hd_k) * (hd_k ** -0.5)
    k = split(k, hd_k)
    v = split(v, hd_v)
    logits = jnp.einsum('bhkd,bhqd->bhqk', k, q)
    bias = -1e9 * jnp.triu(jnp.ones((S, S), jnp.float32), 1)
    weights = jax.nn.softmax(logits + bias, axis=-1)
    out = jnp.einsum('bhqk,bhkd->bhqd', weights, v)
    out = out.transpose(0, 2, 1, 3).reshape(B, S, vd)
    return out @ Wo.T


if __name__ == "__main__":
    # hparams: hidden_size=32, total_key_depth=32, total_value_depth=32,
    #          attn_num_heads=2, attn_type='global'
    B, S, H = 2, 8, 32
    kd, vd, num_heads = 32, 32, 2

    key = jax.random.PRNGKey(0)
    kx, kq, kk, kv, ko = jax.random.split(key, 5)
    X = jax.random.normal(kx, (B, S, H), dtype=jnp.float32)
    Wq = jax.random.normal(kq, (kd, H), dtype=jnp.float32) * 0.05
    Wk = jax.random.normal(kk, (kd, H), dtype=jnp.float32) * 0.05
    Wv = jax.random.normal(kv, (vd, H), dtype=jnp.float32) * 0.05
    Wo = jax.random.normal(ko, (H, vd), dtype=jnp.float32) * 0.05

    ref = attn_reference(X, Wq, Wk, Wv, Wo, num_heads)

    # Default (f32 MXU inputs) path.
    out = attn_forward(X, Wq, Wk, Wv, Wo, num_heads)
    out = jax.block_until_ready(out)
    assert out.shape == (B, S, H)
    assert jnp.allclose(out, ref, atol=2e-3, rtol=2e-3), (
        float(jnp.max(jnp.abs(out - ref))))

    # bf16 MXU-input path (f32 softmax/accumulation preserved in-kernel).
    out_bf16 = attn_forward(X, Wq, Wk, Wv, Wo, num_heads,
                            compute_dtype=jnp.bfloat16)
    out_bf16 = jax.block_until_ready(out_bf16)
    assert out_bf16.shape == (B, S, H)
    assert jnp.allclose(out_bf16, ref, atol=5e-2, rtol=5e-2), (
        float(jnp.max(jnp.abs(out_bf16 - ref))))

    print("KERNEL_OK")
</pallas_src>

<mosaic_0001>
module attributes {stable_mosaic.version = 11 : i64} {
  func.func @_attn_kernel(%arg0: i32, %arg1: memref<1x8x32xf32, #tpu.memory_space<vmem>>, %arg2: memref<32x96xf32, #tpu.memory_space<vmem>>, %arg3: memref<32x32xf32, #tpu.memory_space<vmem>>, %arg4: memref<1x8x32xf32, #tpu.memory_space<vmem>>) attributes {dimension_semantics = [#tpu.dimension_semantics<parallel>], iteration_bounds = array<i64: 2>, scalar_prefetch = 0 : i64, scratch_operands = 0 : i64, tpu.core_type = #tpu.core_type<tc>, window_params = [{transform_indices = @transform_0, window_bounds = array<i64: 1, 8, 32>}, {pipeline_mode = #tpu.pipeline_mode<synchronous>, transform_indices = @transform_1, window_bounds = array<i64: 32, 96>}, {pipeline_mode = #tpu.pipeline_mode<synchronous>, transform_indices = @transform_2, window_bounds = array<i64: 32, 32>}, {transform_indices = @transform_3, window_bounds = array<i64: 1, 8, 32>}]} {
    %c0 = arith.constant 0 : index
    %c0_0 = arith.constant 0 : index
    %c0_1 = arith.constant 0 : index
    %0 = vector.load %arg1[%c0, %c0_0, %c0_1] : memref<1x8x32xf32, #tpu.memory_space<vmem>>, vector<1x8x32xf32>
    %1 = vector.shape_cast %0 : vector<1x8x32xf32> to vector<8x32xf32>
    %c0_2 = arith.constant 0 : index
    %c0_3 = arith.constant 0 : index
    %2 = vector.load %arg2[%c0_2, %c0_3] : memref<32x96xf32, #tpu.memory_space<vmem>>, vector<32x96xf32>
    %cst = arith.constant dense<0.000000e+00> : vector<8x96xf32>
    %3 = tpu.matmul %1, %2, %cst {dimension_numbers = #tpu.dot_dimension_numbers<[1], [0], [0], [1], [0, 0, 1, 1], [], []>} : vector<8x32xf32>, vector<32x96xf32>, vector<8x96xf32> -> vector<8x96xf32>
    %4 = tpu.iota {dimensions = array<i32: 0>} : vector<8x8xi32>
    %5 = tpu.iota {dimensions = array<i32: 1>} : vector<8x8xi32>
    %6 = arith.cmpi sgt, %5, %4 : vector<8x8xi32>
    %cst_4 = arith.constant -1.000000e+09 : f32
    %cst_5 = arith.constant 0.000000e+00 : f32
    %7 = vector.broadcast %cst_4 : f32 to vector<8x8xf32>
    %8 = vector.broadcast %cst_5 : f32 to vector<8x8xf32>
    %9 = arith.select %6, %7, %8 : vector<8x8xi1>, vector<8x8xf32>
    %c0_6 = arith.constant 0 : index
    %c0_7 = arith.constant 0 : index
    %10 = vector.load %arg3[%c0_6, %c0_7] : memref<32x32xf32, #tpu.memory_space<vmem>>, vector<32x32xf32>
    %cst_8 = arith.constant 0.000000e+00 : f32
    %11 = vector.broadcast %cst_8 : f32 to vector<8x32xf32>
    %12 = vector.extract_strided_slice %3 {offsets = [0, 0], sizes = [8, 16], strides = [1, 1]} : vector<8x96xf32> to vector<8x16xf32>
    %13 = vector.extract_strided_slice %3 {offsets = [0, 32], sizes = [8, 16], strides = [1, 1]} : vector<8x96xf32> to vector<8x16xf32>
    %14 = vector.extract_strided_slice %3 {offsets = [0, 64], sizes = [8, 16], strides = [1, 1]} : vector<8x96xf32> to vector<8x16xf32>
    %cst_9 = arith.constant dense<0.000000e+00> : vector<8x8xf32>
    %15 = tpu.matmul %12, %13, %cst_9 {dimension_numbers = #tpu.dot_dimension_numbers<[1], [1], [0], [0], [0, 0, 1, 0], [], []>} : vector<8x16xf32>, vector<8x16xf32>, vector<8x8xf32> -> vector<8x8xf32>
    %cst_10 = arith.constant 2.500000e-01 : f32
    %16 = vector.broadcast %cst_10 : f32 to vector<8x8xf32>
    %17 = arith.mulf %15, %16 : vector<8x8xf32>
    %18 = arith.addf %17, %9 : vector<8x8xf32>
    %cst_11 = arith.constant dense<0xFF800000> : vector<8xf32>
    %19 = vector.multi_reduction <maximumf>, %18, %cst_11 [1] : vector<8x8xf32> to vector<8xf32>
    %20 = vector.shape_cast %19 : vector<8xf32> to vector<8x1xf32>
    %21 = vector.broadcast %20 : vector<8x1xf32> to vector<8x8xf32>
    %22 = arith.subf %18, %21 : vector<8x8xf32>
    %23 = math.exp %22 : vector<8x8xf32>
    %cst_12 = arith.constant dense<0.000000e+00> : vector<8xf32>
    %24 = vector.multi_reduction <add>, %23, %cst_12 [1] : vector<8x8xf32> to vector<8xf32>
    %25 = vector.shape_cast %24 : vector<8xf32> to vector<8x1xf32>
    %26 = tpu.reciprocal %25 {approx = true} : vector<8x1xf32> -> vector<8x1xf32>
    %27 = vector.broadcast %26 : vector<8x1xf32> to vector<8x8xf32>
    %28 = arith.mulf %23, %27 : vector<8x8xf32>
    %cst_13 = arith.constant dense<0.000000e+00> : vector<8x16xf32>
    %29 = tpu.matmul %28, %14, %cst_13 {dimension_numbers = #tpu.dot_dimension_numbers<[1], [0], [0], [1], [0, 0, 1, 1], [], []>} : vector<8x8xf32>, vector<8x16xf32>, vector<8x16xf32> -> vector<8x16xf32>
    %30 = vector.extract_strided_slice %10 {offsets = [0, 0], sizes = [16, 32], strides = [1, 1]} : vector<32x32xf32> to vector<16x32xf32>
    %cst_14 = arith.constant dense<0.000000e+00> : vector<8x32xf32>
    %31 = tpu.matmul %29, %30, %cst_14 {dimension_numbers = #tpu.dot_dimension_numbers<[1], [0], [0], [1], [0, 0, 1, 1], [], []>} : vector<8x16xf32>, vector<16x32xf32>, vector<8x32xf32> -> vector<8x32xf32>
    %32 = arith.addf %11, %31 : vector<8x32xf32>
    %33 = vector.extract_strided_slice %3 {offsets = [0, 16], sizes = [8, 16], strides = [1, 1]} : vector<8x96xf32> to vector<8x16xf32>
    %34 = vector.extract_strided_slice %3 {offsets = [0, 48], sizes = [8, 16], strides = [1, 1]} : vector<8x96xf32> to vector<8x16xf32>
    %35 = vector.extract_strided_slice %3 {offsets = [0, 80], sizes = [8, 16], strides = [1, 1]} : vector<8x96xf32> to vector<8x16xf32>
    %cst_15 = arith.constant dense<0.000000e+00> : vector<8x8xf32>
    %36 = tpu.matmul %33, %34, %cst_15 {dimension_numbers = #tpu.dot_dimension_numbers<[1], [1], [0], [0], [0, 0, 1, 0], [], []>} : vector<8x16xf32>, vector<8x16xf32>, vector<8x8xf32> -> vector<8x8xf32>
    %cst_16 = arith.constant 2.500000e-01 : f32
    %37 = vector.broadcast %cst_16 : f32 to vector<8x8xf32>
    %38 = arith.mulf %36, %37 : vector<8x8xf32>
    %39 = arith.addf %38, %9 : vector<8x8xf32>
    %cst_17 = arith.constant dense<0xFF800000> : vector<8xf32>
    %40 = vector.multi_reduction <maximumf>, %39, %cst_17 [1] : vector<8x8xf32> to vector<8xf32>
    %41 = vector.shape_cast %40 : vector<8xf32> to vector<8x1xf32>
    %42 = vector.broadcast %41 : vector<8x1xf32> to vector<8x8xf32>
    %43 = arith.subf %39, %42 : vector<8x8xf32>
    %44 = math.exp %43 : vector<8x8xf32>
    %cst_18 = arith.constant dense<0.000000e+00> : vector<8xf32>
    %45 = vector.multi_reduction <add>, %44, %cst_18 [1] : vector<8x8xf32> to vector<8xf32>
    %46 = vector.shape_cast %45 : vector<8xf32> to vector<8x1xf32>
    %47 = tpu.reciprocal %46 {approx = true} : vector<8x1xf32> -> vector<8x1xf32>
    %48 = vector.broadcast %47 : vector<8x1xf32> to vector<8x8xf32>
    %49 = arith.mulf %44, %48 : vector<8x8xf32>
    %cst_19 = arith.constant dense<0.000000e+00> : vector<8x16xf32>
    %50 = tpu.matmul %49, %35, %cst_19 {dimension_numbers = #tpu.dot_dimension_numbers<[1], [0], [0], [1], [0, 0, 1, 1], [], []>} : vector<8x8xf32>, vector<8x16xf32>, vector<8x16xf32> -> vector<8x16xf32>
    %51 = vector.extract_strided_slice %10 {offsets = [16, 0], sizes = [16, 32], strides = [1, 1]} : vector<32x32xf32> to vector<16x32xf32>
    %cst_20 = arith.constant dense<0.000000e+00> : vector<8x32xf32>
    %52 = tpu.matmul %50, %51, %cst_20 {dimension_numbers = #tpu.dot_dimension_numbers<[1], [0], [0], [1], [0, 0, 1, 1], [], []>} : vector<8x16xf32>, vector<16x32xf32>, vector<8x32xf32> -> vector<8x32xf32>
    %53 = arith.addf %32, %52 : vector<8x32xf32>
    %c0_21 = arith.constant 0 : index
    %c0_22 = arith.constant 0 : index
    %c0_23 = arith.constant 0 : index
    %54 = vector.load %arg4[%c0_21, %c0_22, %c0_23] : memref<1x8x32xf32, #tpu.memory_space<vmem>>, vector<1x8x32xf32>
    %55 = vector.shape_cast %54 : vector<1x8x32xf32> to vector<8x32xf32>
    %56 = vector.shape_cast %53 : vector<8x32xf32> to vector<1x8x32xf32>
    tpu.vector_store %arg4[%c0_21, %c0_22, %c0_23], %56 {strides = array<i32>} : memref<1x8x32xf32, #tpu.memory_space<vmem>>, vector<1x8x32xf32>,
    return
  }
  func.func @transform_0(%arg0: i32) -> (i32, i32, i32) {
    %c0_i32 = arith.constant 0 : i32
    %c0_i32_0 = arith.constant 0 : i32
    %c0_i32_1 = arith.constant 0 : i32
    return %arg0, %c0_i32, %c0_i32_0 : i32, i32, i32
  }
  func.func @transform_1(%arg0: i32) -> (i32, i32) {
    %c0_i32 = arith.constant 0 : i32
    %c0_i32_0 = arith.constant 0 : i32
    %c0_i32_1 = arith.constant 0 : i32
    return %c0_i32, %c0_i32_0 : i32, i32
  }
  func.func @transform_2(%arg0: i32) -> (i32, i32) {
    %c0_i32 = arith.constant 0 : i32
    %c0_i32_0 = arith.constant 0 : i32
    %c0_i32_1 = arith.constant 0 : i32
    return %c0_i32, %c0_i32_0 : i32, i32
  }
  func.func @transform_3(%arg0: i32) -> (i32, i32, i32) {
    %c0_i32 = arith.constant 0 : i32
    %c0_i32_0 = arith.constant 0 : i32
    %c0_i32_1 = arith.constant 0 : i32
    return %arg0, %c0_i32, %c0_i32_0 : i32, i32, i32
  }
}

</mosaic_0001>

<llo_original>
// kernel: tpu_custom_call.1
$region0: #{tpu_custom_call.1}
  #allocation0 [shape = 'u32[]', space=smem, size = 0x4, offset = 0x4, fixed_abs, tag = 'smem constant byte address 0x4 - core index']
  #allocation1 [shape = 'u32[144,128]{1,0:T(1,128)}', space=vmem, size = 0x12000, scoped, tag = 'internal scratch']
  %s0 = inlined_call_operand.hbm [shape: f32[2,8,32], index: 0, kind: input, shape index: {}]
  %s1 = inlined_call_operand.hbm [shape: f32[32,96], index: 1, kind: input, shape index: {}]
  %s2 = inlined_call_operand.hbm [shape: f32[32,32], index: 2, kind: input, shape index: {}]
  %s3 = inlined_call_operand.hbm [shape: f32[2,8,32], index: 3, kind: output, shape index: {}]
  %s4 = sld [smem:[#allocation0]]
  $region57: #{tpu_custom_call.1} parent=0
    _
  %s6 = ssub.s32 1, %s4
  %s7 = scalar_select 0, %s6, %s4
  $region1: #{tpu_custom_call.1} parent=0
    #allocation2 [shape = 'u8[8192]{0}', space=vmem, size = 0x2000, scoped, tag = 'input window, operand 0']
    #allocation3 [shape = 's32[2]{0}', space=sflag, size = 0x8, scoped, tag = 'scoped memory for tpu_custom_call.1']
    #allocation4 [shape = 's32[2]{0}', space=sflag, size = 0x8, scoped, tag = 'scoped memory for tpu_custom_call.1']
    #allocation5 [shape = 'u8[16384]{0}', space=vmem, size = 0x4000, scoped, tag = 'input window, operand 1, single buffered']
    #allocation6 [shape = 's32[1]{0}', space=sflag, size = 0x4, scoped, tag = 'scoped memory for tpu_custom_call.1']
    #allocation7 [shape = 'u8[16384]{0}', space=vmem, size = 0x4000, scoped, tag = 'input window, operand 2, single buffered']
    #allocation8 [shape = 'u8[8192]{0}', space=vmem, size = 0x2000, scoped, tag = 'output window, operand 0']
    %8 = vsyncpa [#allocation3], 0
    %s9 = scalar_lea.sflag [#allocation3], 1
    %10 = vsyncpa %s9, 0
    %11 = vsyncpa [#allocation6], 0
    %12 = vsyncpa [#allocation4], 0
    %s13 = scalar_lea.sflag [#allocation4], 1
    %14 = vsyncpa %s13, 0
    loop: start=0, step=1, limit=4
    $region2: #{tpu_custom_call.1} parent=1 // loop_pre_header
      _
    $region3: #{tpu_custom_call.1} parent=1 // loop_header
      %s16 = sphi 0, %s20
      %p17 = scmp.ge.s32.totalorder %s16, 4
      %s26 = sphi 0, %s28
      %s29 = sphi 0, %s26
      %s30 = sphi 0, %s29
      %s46 = sphi 0, %s30
      %s50 = sphi 0, %s50
      %s52 = sphi 0, %s50
      %s53 = sphi 0, %s52
      %s67 = sphi 0, %s53
      %s71 = sphi 0, %s71
      %s73 = sphi 0, %s71
      %s74 = sphi 0, %s73
      %s88 = sphi 0, %s74
      %s94 = sphi 0, %s96
      %s97 = sphi 0, %s94
      %s98 = sphi 0, %s97
      %s114 = sphi 0, %s98
    $region4: #{tpu_custom_call.1} parent=1 // loop_header_branch
      %19 = sbr.rel (%p17) target = $region8
    $region5: #{tpu_custom_call.1} parent=1 // loop_body
      %s21 = ssub.s32 %s16, 1
      %s22 = ssub.s32 %s16, 2
      %s23 = sadd.s32 %s16, 1
      %s24 = ssub.s32 %s16, %s23
      %p25 = scmp.eq.s32.totalorder %s24, 0
      %s27 = sadd.s32 %s26, 1
      %s28 = scalar_select %p25, %s26, %s27
      %p31 = pneg %p25
      %p32 = scmp.eq.s32.totalorder %s16, 1
      %p33 = por %p31, %p32
      %p34 = scmp.ne.s32.totalorder %s26, %s29
      %p35 = scmp.eq.s32.totalorder %s16, 0
      %p36 = por %p34, %p35
      %p37 = scmp.ne.s32.totalorder %s26, %s29
      %p38 = scmp.eq.s32.totalorder %s21, 1
      %p39 = por %p37, %p38
      %p40 = scmp.ne.s32.totalorder %s29, %s30
      %p41 = scmp.eq.s32.totalorder %s21, 0
      %p42 = por %p40, %p41
      %p43 = scmp.ne.s32.totalorder %s29, %s30
      %p44 = scmp.eq.s32.totalorder %s22, 1
      %p45 = por %p43, %p44
      %p47 = scmp.ne.s32.totalorder %s30, %s46
      %p48 = scmp.eq.s32.totalorder %s22, 0
      %p49 = por %p47, %p48
      %s51 = sadd.s32 %s50, 1
      %p54 = scmp.eq.s32.totalorder %s16, 1
      %p55 = scmp.ne.s32.totalorder %s50, %s52
      %p56 = scmp.eq.s32.totalorder %s16, 0
      %p57 = por %p55, %p56
      %p58 = scmp.ne.s32.totalorder %s50, %s52
      %p59 = scmp.eq.s32.totalorder %s21, 1
      %p60 = por %p58, %p59
      %p61 = scmp.ne.s32.totalorder %s52, %s53
      %p62 = scmp.eq.s32.totalorder %s21, 0
      %p63 = por %p61, %p62
      %p64 = scmp.ne.s32.totalorder %s52, %s53
      %p65 = scmp.eq.s32.totalorder %s22, 1
      %p66 = por %p64, %p65
      %p68 = scmp.ne.s32.totalorder %s53, %s67
      %p69 = scmp.eq.s32.totalorder %s22, 0
      %p70 = por %p68, %p69
      %s72 = sadd.s32 %s71, 1
      %p75 = scmp.eq.s32.totalorder %s16, 1
      %p76 = scmp.ne.s32.totalorder %s71, %s73
      %p77 = scmp.eq.s32.totalorder %s16, 0
      %p78 = por %p76, %p77
      %p79 = scmp.ne.s32.totalorder %s71, %s73
      %p80 = scmp.eq.s32.totalorder %s21, 1
      %p81 = por %p79, %p80
      %p82 = scmp.ne.s32.totalorder %s73, %s74
      %p83 = scmp.eq.s32.totalorder %s21, 0
      %p84 = por %p82, %p83
      %p85 = scmp.ne.s32.totalorder %s73, %s74
      %p86 = scmp.eq.s32.totalorder %s22, 1
      %p87 = por %p85, %p86
      %p89 = scmp.ne.s32.totalorder %s74, %s88
      %p90 = scmp.eq.s32.totalorder %s22, 0
      %p91 = por %p89, %p90
      %s92 = ssub.s32 %s16, %s23
      %p93 = scmp.eq.s32.totalorder %s92, 0
      %s95 = sadd.s32 %s94, 1
      %s96 = scalar_select %p93, %s94, %s95
      %p99 = pneg %p93
      %p100 = scmp.eq.s32.totalorder %s16, 1
      %p101 = por %p99, %p100
      %p102 = scmp.ne.s32.totalorder %s94, %s97
      %p103 = scmp.eq.s32.totalorder %s16, 0
      %p104 = por %p102, %p103
      %p105 = scmp.ne.s32.totalorder %s94, %s97
      %p106 = scmp.eq.s32.totalorder %s21, 1
      %p107 = por %p105, %p106
      %p108 = scmp.ne.s32.totalorder %s97, %s98
      %p109 = scmp.eq.s32.totalorder %s21, 0
      %p110 = por %p108, %p109
      %p111 = scmp.ne.s32.totalorder %s97, %s98
      %p112 = scmp.eq.s32.totalorder %s22, 1
      %p113 = por %p111, %p112
      %p115 = scmp.ne.s32.totalorder %s98, %s114
      %p116 = scmp.eq.s32.totalorder %s22, 0
      %p117 = por %p115, %p116
      %p118 = scmp.le.s32.totalorder 1, %s16
      %p119 = scmp.lt.s32.totalorder %s16, 3
      %p120 = pnand %p118, %p119
      %p121 = pneg %p120
      // Predicated region
      $region9: #{tpu_custom_call.1} parent=5 // pred_check
        _
      $region10: #{tpu_custom_call.1} parent=5 // pred_check_branch
        %123 = sbr.rel (%p120) target = $region12
      $region11: #{tpu_custom_call.1} parent=5 // pred_region
        %s124 = ssub.s32 %s16, 1
        // Predicated region
        $region13: #{tpu_custom_call.1} parent=11 // pred_check
          %p125 = pneg %p63
        $region14: #{tpu_custom_call.1} parent=11 // pred_check_branch
          %127 = sbr.rel (%p125) target = $region16
        $region15: #{tpu_custom_call.1} parent=11 // pred_region
          %s129 = ssub.s32 512, 512
          %130 = vsyncadd [#allocation6], %s129
          %s131 = sshll.u32 [#allocation5], 4
          %s132 = int_to_ptr.vmem [resolvable:$true] %s131
          %137 = dma.hbm_to_vmem [thread:$0]  %s1, 512, %s132, [#allocation6], 128, 128, 8
        $region16: #{tpu_custom_call.1} parent=11 // pred_fallthru
          _
        // Predicated region
        $region17: #{tpu_custom_call.1} parent=11 // pred_check
          %p138 = pneg %p84
        $region18: #{tpu_custom_call.1} parent=11 // pred_check_branch
          %140 = sbr.rel (%p138) target = $region20
        $region19: #{tpu_custom_call.1} parent=11 // pred_region
          %s142 = ssub.s32 512, 512
          %143 = vsyncadd [#allocation6], %s142
          %s144 = sshll.u32 [#allocation7], 4
          %s145 = int_to_ptr.vmem [resolvable:$true] %s144
          %150 = dma.hbm_to_vmem [thread:$0]  %s2, 512, %s145, [#allocation6], 128, 128, 8
        $region20: #{tpu_custom_call.1} parent=11 // pred_fallthru
          _
      $region12: #{tpu_custom_call.1} parent=5 // pred_fallthru
        _
      %p151 = scmp.lt.s32.totalorder %s16, 2
      // Predicated region
      $region21: #{tpu_custom_call.1} parent=5 // pred_check
        %p152 = pneg %p151
      $region22: #{tpu_custom_call.1} parent=5 // pred_check_branch
        %154 = sbr.rel (%p152) target = $region24
      $region23: #{tpu_custom_call.1} parent=5 // pred_region
        // Predicated region
        $region25: #{tpu_custom_call.1} parent=23 // pred_check
          %p155 = pneg %p36
        $region26: #{tpu_custom_call.1} parent=23 // pred_check_branch
          %157 = sbr.rel (%p155) target = $region28
        $region27: #{tpu_custom_call.1} parent=23 // pred_region
          %s158 = sand.u32 %s26, 1
          %s159 = scalar_lea.sflag [#allocation3], %s158
          %s160 = sand.u32 %s26, 1
          %s161 = smul.addr %s160, 8
          %s162 = scalar_lea.vmem [#allocation2], %s161
          %s164 = ssub.s32 128, 128
          %165 = vsyncadd %s159, %s164
          %s166 = smul.addr %s16, 128
          %s167 = scalar_lea.hbm %s0, %s166
          %s169 = sshll.u32 %s162, 4
          %s170 = int_to_ptr.vmem [resolvable:$true] %s169
          %172 = dma.hbm_to_vmem [thread:$0]  %s167, 128, %s170, %s159
        $region28: #{tpu_custom_call.1} parent=23 // pred_fallthru
          _
      $region24: #{tpu_custom_call.1} parent=5 // pred_fallthru
        _
      %p173 = scmp.le.s32.totalorder 1, %s16
      %p174 = scmp.lt.s32.totalorder %s16, 3
      %p175 = pnand %p173, %p174
      %p176 = pneg %p175
      // Predicated region
      $region29: #{tpu_custom_call.1} parent=5 // pred_check
        _
      $region30: #{tpu_custom_call.1} parent=5 // pred_check_branch
        %178 = sbr.rel (%p175) target = $region32
      $region31: #{tpu_custom_call.1} parent=5 // pred_region
        %s179 = ssub.s32 %s16, 1
        %s180 = sand.u32 %s29, 1
        %s181 = scalar_lea.sflag [#allocation3], %s180
        %s182 = sand.u32 %s29, 1
        %s183 = smul.addr %s182, 8
        %s184 = scalar_lea.vmem [#allocation2], %s183
        // Predicated region
        $region33: #{tpu_custom_call.1} parent=31 // pred_check
          %p185 = pneg %p42
        $region34: #{tpu_custom_call.1} parent=31 // pred_check_branch
          %187 = sbr.rel (%p185) target = $region36
        $region35: #{tpu_custom_call.1} parent=31 // pred_region
          %188 = dma.done %s181, 128
        $region36: #{tpu_custom_call.1} parent=31 // pred_fallthru
          _
        // Predicated region
        $region37: #{tpu_custom_call.1} parent=31 // pred_check
          %p189 = pneg %p63
        $region38: #{tpu_custom_call.1} parent=31 // pred_check_branch
          %191 = sbr.rel (%p189) target = $region40
        $region39: #{tpu_custom_call.1} parent=31 // pred_region
          %192 = dma.done [#allocation6], 512
        $region40: #{tpu_custom_call.1} parent=31 // pred_fallthru
          _
        // Predicated region
        $region41: #{tpu_custom_call.1} parent=31 // pred_check
          %p193 = pneg %p84
        $region42: #{tpu_custom_call.1} parent=31 // pred_check_branch
          %195 = sbr.rel (%p193) target = $region44
        $region43: #{tpu_custom_call.1} parent=31 // pred_region
          %196 = dma.done [#allocation6], 512
        $region44: #{tpu_custom_call.1} parent=31 // pred_fallthru
          _
        %s197 = sand.u32 %s29, 1
        %s198 = scalar_lea.sflag [#allocation3], %s197
        %s199 = sand.u32 %s29, 1
        %s200 = smul.addr %s199, 8
        %s201 = scalar_lea.vmem [#allocation2], %s200
        %p202 = pneg %p42
        %p203 = pneg %p39
        %p204 = pneg %p63
        %p205 = pneg %p60
        %p206 = pneg %p84
        %p207 = pneg %p81
        %p208 = pneg %p110
        %p209 = pneg %p107
        %s210 = sand.u32 %s97, 1
        %s211 = scalar_lea.sflag [#allocation4], %s210
        %s212 = sand.u32 %s97, 1
        %s213 = smul.addr %s212, 8
        %s214 = scalar_lea.vmem [#allocation8], %s213
        %v215 = vld [vmem:[%s184] sm:$0xff]
        %v216 = vld [vmem:[#allocation5] sm:$0xff]
        %v217 = vld [vmem:[#allocation5 + $0x8] sm:$0xff]
        %v218 = vld [vmem:[#allocation5 + $0x10] sm:$0xff]
        %v219 = vld [vmem:[#allocation5 + $0x18] sm:$0xff]
        %vm220 = vcmask 261120
        %v222 = vsel %vm220, %v215, 0
        %224 = vmatprep.subr.mxu0 0.0
        %225 = vmatpush1.msra.mxu0 0.0
        %226 = vmatprep.subr.mxu0 0.0
        %227 = vmatpush1.msra.mxu0 0.0
        %228 = vmatprep.subr.mxu0 0.0
        %229 = vmatpush1.msra.mxu0 0.0
        %230 = vmatprep.subr.mxu0 0.0
        %231 = vmatpush1.msra.mxu0 0.0
        %232 = vmatprep.subr.mxu0 0.0
        %233 = vmatpush1.msra.mxu0 0.0
        %234 = vmatprep.subr.mxu0 0.0
        %235 = vmatpush1.msra.mxu0 0.0
        %236 = vmatprep.subr.mxu0 0.0
        %237 = vmatpush1.msra.mxu0 0.0
        %238 = vmatprep.subr.mxu0 0.0
        %239 = vmatpush1.msra.mxu0 0.0
        %240 = vmatprep.subr.mxu0 0.0
        %241 = vmatpush1.msra.mxu0 0.0
        %242 = vmatprep.subr.mxu0 0.0
        %243 = vmatpush1.msra.mxu0 0.0
        %244 = vmatprep.subr.mxu0 0.0
        %245 = vmatpush1.msra.mxu0 0.0
        %246 = vmatprep.subr.mxu0 0.0
        %247 = vmatpush1.msra.mxu0 0.0
        %248 = vmatprep.subr.mxu0 0.0
        %249 = vmatpush1.msra.mxu0 %v219
        %250 = vmatprep.subr.mxu0 0.0
        %251 = vmatpush1.msra.mxu0 %v218
        %252 = vmatprep.subr.mxu0 0.0
        %253 = vmatpush1.msra.mxu0 %v217
        %254 = vmatprep.subr.mxu0 0.0
        %255 = vmatpush1.msra.mxu0 %v216
        %256 = vmatprep.subr.mxu0 0.0
        %257 = vmatpush2.msra.mxu0 0.0
        %258 = vmatprep.subr.mxu0 0.0
        %259 = vmatpush2.msra.mxu0 0.0
        %260 = vmatprep.subr.mxu0 0.0
        %261 = vmatpush2.msra.mxu0 0.0
        %262 = vmatprep.subr.mxu0 0.0
        %263 = vmatpush2.msra.mxu0 0.0
        %264 = vmatprep.subr.mxu0 0.0
        %265 = vmatpush2.msra.mxu0 0.0
        %266 = vmatprep.subr.mxu0 0.0
        %267 = vmatpush2.msra.mxu0 0.0
        %268 = vmatprep.subr.mxu0 0.0
        %269 = vmatpush2.msra.mxu0 0.0
        %270 = vmatprep.subr.mxu0 0.0
        %271 = vmatpush2.msra.mxu0 0.0
        %272 = vmatprep.subr.mxu0 0.0
        %273 = vmatpush2.msra.mxu0 0.0
        %274 = vmatprep.subr.mxu0 0.0
        %275 = vmatpush2.msra.mxu0 0.0
        %276 = vmatprep.subr.mxu0 0.0
        %277 = vmatpush2.msra.mxu0 0.0
        %278 = vmatprep.subr.mxu0 0.0
        %279 = vmatpush2.msra.mxu0 0.0
        %280 = vmatprep.subr.mxu0 0.0
        %281 = vmatpush2.msra.mxu0 0.0
        %282 = vmatprep.subr.mxu0 0.0
        %283 = vmatpush2.msra.mxu0 0.0
        %284 = vmatprep.subr.mxu0 0.0
        %285 = vmatpush2.msra.mxu0 0.0
        %286 = vmatprep.subr.mxu0 0.0
        %287 = vmatpush2.msra.mxu0 0.0
        %288 = vmatprep.mubr.f32.mxu0 0.0
        %289 = vmatmul.mubr.f32.gmra.mxu0 %v222
        %v290 = vpop.f32.mrf.mxu0
        %v291 = vadd.f32 0.0, %v290
        %v292 = vpop.f32.mrf.mxu0
        %293 = vdwg.mxu0
        %v294 = vlaneseq
        %v295 = vshrl.u32 %v294, 7
        %v296 = vlaneseq
        %v297 = vand.u32 %v296, 127
        %vm298 = vcmp.gt.s32.totalorder %v297, %v295
        %v299 = vsel %vm298, -1e+09, 0.0
        %v300 = vld [vmem:[#allocation7] sm:$0xff]
        %v301 = vld [vmem:[#allocation7 + $0x8] sm:$0xff]
        %v302 = vld [vmem:[#allocation7 + $0x10] sm:$0xff]
        %v303 = vld [vmem:[#allocation7 + $0x18] sm:$0xff]
        %305 = vrot.lane.b32.xlu0 %v291, 96
        %v306 = vpop.permute.xlu0 %305
        %vm307 = vcmask 130048
        %v308 = vsel %vm307, %v291, 0
        %v310 = vsel %vm307, %v306, 0
        %312 = vmatprep.subr.mxu0 0.0
        %313 = vmatpush1.xpose.msra.mxu0 0.0
        %314 = vmatprep.subr.mxu0 0.0
        %315 = vmatpush1.xpose.msra.mxu0 0.0
        %316 = vmatprep.subr.mxu0 0.0
        %317 = vmatpush1.xpose.msra.mxu0 0.0
        %318 = vmatprep.subr.mxu0 0.0
        %319 = vmatpush1.xpose.msra.mxu0 0.0
        %320 = vmatprep.subr.mxu0 0.0
        %321 = vmatpush1.xpose.msra.mxu0 0.0
        %322 = vmatprep.subr.mxu0 0.0
        %323 = vmatpush1.xpose.msra.mxu0 0.0
        %324 = vmatprep.subr.mxu0 0.0
        %325 = vmatpush1.xpose.msra.mxu0 0.0
        %326 = vmatprep.subr.mxu0 0.0
        %327 = vmatpush1.xpose.msra.mxu0 0.0
        %328 = vmatprep.subr.mxu0 0.0
        %329 = vmatpush1.xpose.msra.mxu0 0.0
        %330 = vmatprep.subr.mxu0 0.0
        %331 = vmatpush1.xpose.msra.mxu0 0.0
        %332 = vmatprep.subr.mxu0 0.0
        %333 = vmatpush1.xpose.msra.mxu0 0.0
        %334 = vmatprep.subr.mxu0 0.0
        %335 = vmatpush1.xpose.msra.mxu0 0.0
        %336 = vmatprep.subr.mxu0 0.0
        %337 = vmatpush1.xpose.msra.mxu0 0.0
        %338 = vmatprep.subr.mxu0 0.0
        %339 = vmatpush1.xpose.msra.mxu0 0.0
        %340 = vmatprep.subr.mxu0 0.0
        %341 = vmatpush1.xpose.msra.mxu0 0.0
        %342 = vmatprep.subr.mxu0 0.0
        %343 = vmatpush1.xpose.msra.mxu0 %v310
        %344 = vmatprep.subr.mxu0 0.0
        %345 = vmatpush2.xpose.msra.mxu0 0.0
        %346 = vmatprep.subr.mxu0 0.0
        %347 = vmatpush2.xpose.msra.mxu0 0.0
        %348 = vmatprep.subr.mxu0 0.0
        %349 = vmatpush2.xpose.msra.mxu0 0.0
        %350 = vmatprep.subr.mxu0 0.0
        %351 = vmatpush2.xpose.msra.mxu0 0.0
        %352 = vmatprep.subr.mxu0 0.0
        %353 = vmatpush2.xpose.msra.mxu0 0.0
        %354 = vmatprep.subr.mxu0 0.0
        %355 = vmatpush2.xpose.msra.mxu0 0.0
        %356 = vmatprep.subr.mxu0 0.0
        %357 = vmatpush2.xpose.msra.mxu0 0.0
        %358 = vmatprep.subr.mxu0 0.0
        %359 = vmatpush2.xpose.msra.mxu0 0.0
        %360 = vmatprep.subr.mxu0 0.0
        %361 = vmatpush2.xpose.msra.mxu0 0.0
        %362 = vmatprep.subr.mxu0 0.0
        %363 = vmatpush2.xpose.msra.mxu0 0.0
        %364 = vmatprep.subr.mxu0 0.0
        %365 = vmatpush2.xpose.msra.mxu0 0.0
        %366 = vmatprep.subr.mxu0 0.0
        %367 = vmatpush2.xpose.msra.mxu0 0.0
        %368 = vmatprep.subr.mxu0 0.0
        %369 = vmatpush2.xpose.msra.mxu0 0.0
        %370 = vmatprep.subr.mxu0 0.0
        %371 = vmatpush2.xpose.msra.mxu0 0.0
        %372 = vmatprep.subr.mxu0 0.0
        %373 = vmatpush2.xpose.msra.mxu0 0.0
        %374 = vmatprep.subr.mxu0 0.0
        %375 = vmatpush2.xpose.msra.mxu0 0.0
        %376 = vmatprep.mubr.f32.mxu0 0.0
        %377 = vmatmul.mubr.f32.gmra.mxu0 %v308
        %v378 = vpop.f32.mrf.mxu0
        %v379 = vadd.f32 0.0, %v378
        %v380 = vpop.f32.mrf.mxu0
        %381 = vdwg.mxu0
        %v382 = vmul.f32 %v379, 0.25
        %v383 = vadd.f32 %v382, %v299
        %vm384 = vcmask 64512
        %v385 = vsel %vm384, %v383, -inf
        %386 = vmax.xlane.f32.xlu0 %v385
        %v387 = vpop.xlane.xlu0 %386
        %v388 = vsub.f32 %v383, %v387
        %v389 = vmul.f32 %v388, 1.442695
        %v390 = vpow.pop %v389
        %v391 = vsel %vm384, %v390, 0.0
        %392 = vadd.xlane.f32.xlu0 %v391
        %v393 = vpop.xlane.xlu0 %392
        %v394 = vrcp.pop %v393
        %v395 = vmul.f32 %v390, %v394
        %396 = vrot.lane.b32.xlu0 %v291, 64
        %v397 = vpop.permute.xlu0 %396
        %v400 = vsel %vm384, %v395, 0
        %402 = vmatprep.subr.mxu0 0.0
        %403 = vmatpush1.msra.mxu0 0.0
        %404 = vmatprep.subr.mxu0 0.0
        %405 = vmatpush1.msra.mxu0 0.0
        %406 = vmatprep.subr.mxu0 0.0
        %407 = vmatpush1.msra.mxu0 0.0
        %408 = vmatprep.subr.mxu0 0.0
        %409 = vmatpush1.msra.mxu0 0.0
        %410 = vmatprep.subr.mxu0 0.0
        %411 = vmatpush1.msra.mxu0 0.0
        %412 = vmatprep.subr.mxu0 0.0
        %413 = vmatpush1.msra.mxu0 0.0
        %414 = vmatprep.subr.mxu0 0.0
        %415 = vmatpush1.msra.mxu0 0.0
        %416 = vmatprep.subr.mxu0 0.0
        %417 = vmatpush1.msra.mxu0 0.0
        %418 = vmatprep.subr.mxu0 0.0
        %419 = vmatpush1.msra.mxu0 0.0
        %420 = vmatprep.subr.mxu0 0.0
        %421 = vmatpush1.msra.mxu0 0.0
        %422 = vmatprep.subr.mxu0 0.0
        %423 = vmatpush1.msra.mxu0 0.0
        %424 = vmatprep.subr.mxu0 0.0
        %425 = vmatpush1.msra.mxu0 0.0
        %426 = vmatprep.subr.mxu0 0.0
        %427 = vmatpush1.msra.mxu0 0.0
        %428 = vmatprep.subr.mxu0 0.0
        %429 = vmatpush1.msra.mxu0 0.0
        %430 = vmatprep.subr.mxu0 0.0
        %431 = vmatpush1.msra.mxu0 0.0
        %432 = vmatprep.subr.mxu0 0.0
        %433 = vmatpush1.msra.mxu0 %v397
        %434 = vmatprep.subr.mxu0 0.0
        %435 = vmatpush2.msra.mxu0 0.0
        %436 = vmatprep.subr.mxu0 0.0
        %437 = vmatpush2.msra.mxu0 0.0
        %438 = vmatprep.subr.mxu0 0.0
        %439 = vmatpush2.msra.mxu0 0.0
        %440 = vmatprep.subr.mxu0 0.0
        %441 = vmatpush2.msra.mxu0 0.0
        %442 = vmatprep.subr.mxu0 0.0
        %443 = vmatpush2.msra.mxu0 0.0
        %444 = vmatprep.subr.mxu0 0.0
        %445 = vmatpush2.msra.mxu0 0.0
        %446 = vmatprep.subr.mxu0 0.0
        %447 = vmatpush2.msra.mxu0 0.0
        %448 = vmatprep.subr.mxu0 0.0
        %449 = vmatpush2.msra.mxu0 0.0
        %450 = vmatprep.subr.mxu0 0.0
        %451 = vmatpush2.msra.mxu0 0.0
        %452 = vmatprep.subr.mxu0 0.0
        %453 = vmatpush2.msra.mxu0 0.0
        %454 = vmatprep.subr.mxu0 0.0
        %455 = vmatpush2.msra.mxu0 0.0
        %456 = vmatprep.subr.mxu0 0.0
        %457 = vmatpush2.msra.mxu0 0.0
        %458 = vmatprep.subr.mxu0 0.0
        %459 = vmatpush2.msra.mxu0 0.0
        %460 = vmatprep.subr.mxu0 0.0
        %461 = vmatpush2.msra.mxu0 0.0
        %462 = vmatprep.subr.mxu0 0.0
        %463 = vmatpush2.msra.mxu0 0.0
        %464 = vmatprep.subr.mxu0 0.0
        %465 = vmatpush2.msra.mxu0 0.0
        %466 = vmatprep.mubr.f32.mxu0 0.0
        %467 = vmatmul.mubr.f32.gmra.mxu0 %v400
        %v468 = vpop.f32.mrf.mxu0
        %v469 = vadd.f32 0.0, %v468
        %v470 = vpop.f32.mrf.mxu0
        %471 = vdwg.mxu0
        %472 = vrot.lane.b32.xlu0 %v291, 112
        %v473 = vpop.permute.xlu0 %472
        %474 = vrot.lane.b32.xlu0 %v291, 80
        %v475 = vpop.permute.xlu0 %474
        %v476 = vsel %vm307, %v473, 0
        %v478 = vsel %vm307, %v475, 0
        %480 = vmatprep.subr.mxu0 0.0
        %481 = vmatpush1.xpose.msra.mxu0 0.0
        %482 = vmatprep.subr.mxu0 0.0
        %483 = vmatpush1.xpose.msra.mxu0 0.0
        %484 = vmatprep.subr.mxu0 0.0
        %485 = vmatpush1.xpose.msra.mxu0 0.0
        %486 = vmatprep.subr.mxu0 0.0
        %487 = vmatpush1.xpose.msra.mxu0 0.0
        %488 = vmatprep.subr.mxu0 0.0
        %489 = vmatpush1.xpose.msra.mxu0 0.0
        %490 = vmatprep.subr.mxu0 0.0
        %491 = vmatpush1.xpose.msra.mxu0 0.0
        %492 = vmatprep.subr.mxu0 0.0
        %493 = vmatpush1.xpose.msra.mxu0 0.0
        %494 = vmatprep.subr.mxu0 0.0
        %495 = vmatpush1.xpose.msra.mxu0 0.0
        %496 = vmatprep.subr.mxu0 0.0
        %497 = vmatpush1.xpose.msra.mxu0 0.0
        %498 = vmatprep.subr.mxu0 0.0
        %499 = vmatpush1.xpose.msra.mxu0 0.0
        %500 = vmatprep.subr.mxu0 0.0
        %501 = vmatpush1.xpose.msra.mxu0 0.0
        %502 = vmatprep.subr.mxu0 0.0
        %503 = vmatpush1.xpose.msra.mxu0 0.0
        %504 = vmatprep.subr.mxu0 0.0
        %505 = vmatpush1.xpose.msra.mxu0 0.0
        %506 = vmatprep.subr.mxu0 0.0
        %507 = vmatpush1.xpose.msra.mxu0 0.0
        %508 = vmatprep.subr.mxu0 0.0
        %509 = vmatpush1.xpose.msra.mxu0 0.0
        %510 = vmatprep.subr.mxu0 0.0
        %511 = vmatpush1.xpose.msra.mxu0 %v478
        %512 = vmatprep.subr.mxu0 0.0
        %513 = vmatpush2.xpose.msra.mxu0 0.0
        %514 = vmatprep.subr.mxu0 0.0
        %515 = vmatpush2.xpose.msra.mxu0 0.0
        %516 = vmatprep.subr.mxu0 0.0
        %517 = vmatpush2.xpose.msra.mxu0 0.0
        %518 = vmatprep.subr.mxu0 0.0
        %519 = vmatpush2.xpose.msra.mxu0 0.0
        %520 = vmatprep.subr.mxu0 0.0
        %521 = vmatpush2.xpose.msra.mxu0 0.0
        %522 = vmatprep.subr.mxu0 0.0
        %523 = vmatpush2.xpose.msra.mxu0 0.0
        %524 = vmatprep.subr.mxu0 0.0
        %525 = vmatpush2.xpose.msra.mxu0 0.0
        %526 = vmatprep.subr.mxu0 0.0
        %527 = vmatpush2.xpose.msra.mxu0 0.0
        %528 = vmatprep.subr.mxu0 0.0
        %529 = vmatpush2.xpose.msra.mxu0 0.0
        %530 = vmatprep.subr.mxu0 0.0
        %531 = vmatpush2.xpose.msra.mxu0 0.0
        %532 = vmatprep.subr.mxu0 0.0
        %533 = vmatpush2.xpose.msra.mxu0 0.0
        %534 = vmatprep.subr.mxu0 0.0
        %535 = vmatpush2.xpose.msra.mxu0 0.0
        %536 = vmatprep.subr.mxu0 0.0
        %537 = vmatpush2.xpose.msra.mxu0 0.0
        %538 = vmatprep.subr.mxu0 0.0
        %539 = vmatpush2.xpose.msra.mxu0 0.0
        %540 = vmatprep.subr.mxu0 0.0
        %541 = vmatpush2.xpose.msra.mxu0 0.0
        %542 = vmatprep.subr.mxu0 0.0
        %543 = vmatpush2.xpose.msra.mxu0 0.0
        %544 = vmatprep.mubr.f32.mxu0 0.0
        %545 = vmatmul.mubr.f32.gmra.mxu0 %v476
        %v546 = vpop.f32.mrf.mxu0
        %v547 = vadd.f32 0.0, %v546
        %v548 = vpop.f32.mrf.mxu0
        %549 = vdwg.mxu0
        %v550 = vmul.f32 %v547, 0.25
        %v551 = vadd.f32 %v550, %v299
        %v552 = vsel %vm384, %v551, -inf
        %553 = vmax.xlane.f32.xlu0 %v552
        %v554 = vpop.xlane.xlu0 %553
        %v555 = vsub.f32 %v551, %v554
        %v556 = vmul.f32 %v555, 1.442695
        %v557 = vpow.pop %v556
        %v558 = vsel %vm384, %v557, 0.0
        %559 = vadd.xlane.f32.xlu0 %v558
        %v560 = vpop.xlane.xlu0 %559
        %v561 = vrcp.pop %v560
        %v562 = vmul.f32 %v557, %v561
        %563 = vrot.lane.b32.xlu0 %v291, 48
        %v564 = vpop.permute.xlu0 %563
        %v567 = vsel %vm384, %v562, 0
        %569 = vmatprep.subr.mxu0 0.0
        %570 = vmatpush1.msra.mxu0 0.0
        %571 = vmatprep.subr.mxu0 0.0
        %572 = vmatpush1.msra.mxu0 0.0
        %573 = vmatprep.subr.mxu0 0.0
        %574 = vmatpush1.msra.mxu0 0.0
        %575 = vmatprep.subr.mxu0 0.0
        %576 = vmatpush1.msra.mxu0 0.0
        %577 = vmatprep.subr.mxu0 0.0
        %578 = vmatpush1.msra.mxu0 0.0
        %579 = vmatprep.subr.mxu0 0.0
        %580 = vmatpush1.msra.mxu0 0.0
        %581 = vmatprep.subr.mxu0 0.0
        %582 = vmatpush1.msra.mxu0 0.0
        %583 = vmatprep.subr.mxu0 0.0
        %584 = vmatpush1.msra.mxu0 0.0
        %585 = vmatprep.subr.mxu0 0.0
        %586 = vmatpush1.msra.mxu0 0.0
        %587 = vmatprep.subr.mxu0 0.0
        %588 = vmatpush1.msra.mxu0 0.0
        %589 = vmatprep.subr.mxu0 0.0
        %590 = vmatpush1.msra.mxu0 0.0
        %591 = vmatprep.subr.mxu0 0.0
        %592 = vmatpush1.msra.mxu0 0.0
        %593 = vmatprep.subr.mxu0 0.0
        %594 = vmatpush1.msra.mxu0 0.0
        %595 = vmatprep.subr.mxu0 0.0
        %596 = vmatpush1.msra.mxu0 0.0
        %597 = vmatprep.subr.mxu0 0.0
        %598 = vmatpush1.msra.mxu0 0.0
        %599 = vmatprep.subr.mxu0 0.0
        %600 = vmatpush1.msra.mxu0 %v564
        %601 = vmatprep.subr.mxu0 0.0
        %602 = vmatpush2.msra.mxu0 0.0
        %603 = vmatprep.subr.mxu0 0.0
        %604 = vmatpush2.msra.mxu0 0.0
        %605 = vmatprep.subr.mxu0 0.0
        %606 = vmatpush2.msra.mxu0 0.0
        %607 = vmatprep.subr.mxu0 0.0
        %608 = vmatpush2.msra.mxu0 0.0
        %609 = vmatprep.subr.mxu0 0.0
        %610 = vmatpush2.msra.mxu0 0.0
        %611 = vmatprep.subr.mxu0 0.0
        %612 = vmatpush2.msra.mxu0 0.0
        %613 = vmatprep.subr.mxu0 0.0
        %614 = vmatpush2.msra.mxu0 0.0
        %615 = vmatprep.subr.mxu0 0.0
        %616 = vmatpush2.msra.mxu0 0.0
        %617 = vmatprep.subr.mxu0 0.0
        %618 = vmatpush2.msra.mxu0 0.0
        %619 = vmatprep.subr.mxu0 0.0
        %620 = vmatpush2.msra.mxu0 0.0
        %621 = vmatprep.subr.mxu0 0.0
        %622 = vmatpush2.msra.mxu0 0.0
        %623 = vmatprep.subr.mxu0 0.0
        %624 = vmatpush2.msra.mxu0 0.0
        %625 = vmatprep.subr.mxu0 0.0
        %626 = vmatpush2.msra.mxu0 0.0
        %627 = vmatprep.subr.mxu0 0.0
        %628 = vmatpush2.msra.mxu0 0.0
        %629 = vmatprep.subr.mxu0 0.0
        %630 = vmatpush2.msra.mxu0 0.0
        %631 = vmatprep.subr.mxu0 0.0
        %632 = vmatpush2.msra.mxu0 0.0
        %633 = vmatprep.mubr.f32.mxu0 0.0
        %634 = vmatmul.mubr.f32.gmra.mxu0 %v567
        %v635 = vpop.f32.mrf.mxu0
        %v636 = vadd.f32 0.0, %v635
        %v637 = vpop.f32.mrf.mxu0
        %638 = vdwg.mxu0
        %v640 = vsel %vm307, %v636, 0
        %642 = vmatprep.subr.mxu0 0.0
        %643 = vmatpush1.msra.mxu0 0.0
        %644 = vmatprep.subr.mxu0 0.0
        %645 = vmatpush1.msra.mxu0 0.0
        %646 = vmatprep.subr.mxu0 0.0
        %647 = vmatpush1.msra.mxu0 0.0
        %648 = vmatprep.subr.mxu0 0.0
        %649 = vmatpush1.msra.mxu0 0.0
        %650 = vmatprep.subr.mxu0 0.0
        %651 = vmatpush1.msra.mxu0 0.0
        %652 = vmatprep.subr.mxu0 0.0
        %653 = vmatpush1.msra.mxu0 0.0
        %654 = vmatprep.subr.mxu0 0.0
        %655 = vmatpush1.msra.mxu0 0.0
        %656 = vmatprep.subr.mxu0 0.0
        %657 = vmatpush1.msra.mxu0 0.0
        %658 = vmatprep.subr.mxu0 0.0
        %659 = vmatpush1.msra.mxu0 0.0
        %660 = vmatprep.subr.mxu0 0.0
        %661 = vmatpush1.msra.mxu0 0.0
        %662 = vmatprep.subr.mxu0 0.0
        %663 = vmatpush1.msra.mxu0 0.0
        %664 = vmatprep.subr.mxu0 0.0
        %665 = vmatpush1.msra.mxu0 0.0
        %666 = vmatprep.subr.mxu0 0.0
        %667 = vmatpush1.msra.mxu0 0.0
        %668 = vmatprep.subr.mxu0 0.0
        %669 = vmatpush1.msra.mxu0 0.0
        %670 = vmatprep.subr.mxu0 0.0
        %671 = vmatpush1.msra.mxu0 %v303
        %672 = vmatprep.subr.mxu0 0.0
        %673 = vmatpush1.msra.mxu0 %v302
        %674 = vmatprep.subr.mxu0 0.0
        %675 = vmatpush2.msra.mxu0 0.0
        %676 = vmatprep.subr.mxu0 0.0
        %677 = vmatpush2.msra.mxu0 0.0
        %678 = vmatprep.subr.mxu0 0.0
        %679 = vmatpush2.msra.mxu0 0.0
        %680 = vmatprep.subr.mxu0 0.0
        %681 = vmatpush2.msra.mxu0 0.0
        %682 = vmatprep.subr.mxu0 0.0
        %683 = vmatpush2.msra.mxu0 0.0
        %684 = vmatprep.subr.mxu0 0.0
        %685 = vmatpush2.msra.mxu0 0.0
        %686 = vmatprep.subr.mxu0 0.0
        %687 = vmatpush2.msra.mxu0 0.0
        %688 = vmatprep.subr.mxu0 0.0
        %689 = vmatpush2.msra.mxu0 0.0
        %690 = vmatprep.subr.mxu0 0.0
        %691 = vmatpush2.msra.mxu0 0.0
        %692 = vmatprep.subr.mxu0 0.0
        %693 = vmatpush2.msra.mxu0 0.0
        %694 = vmatprep.subr.mxu0 0.0
        %695 = vmatpush2.msra.mxu0 0.0
        %696 = vmatprep.subr.mxu0 0.0
        %697 = vmatpush2.msra.mxu0 0.0
        %698 = vmatprep.subr.mxu0 0.0
        %699 = vmatpush2.msra.mxu0 0.0
        %700 = vmatprep.subr.mxu0 0.0
        %701 = vmatpush2.msra.mxu0 0.0
        %702 = vmatprep.subr.mxu0 0.0
        %703 = vmatpush2.msra.mxu0 0.0
        %704 = vmatprep.subr.mxu0 0.0
        %705 = vmatpush2.msra.mxu0 0.0
        %706 = vmatprep.mubr.f32.mxu0 0.0
        %707 = vmatmul.mubr.f32.gmra.mxu0 %v640
        %v708 = vpop.f32.mrf.mxu0
        %v709 = vadd.f32 0.0, %v708
        %v710 = vpop.f32.mrf.mxu0
        %711 = vdwg.mxu0
        %v713 = vsel %vm307, %v469, 0
        %715 = vmatprep.subr.mxu0 0.0
        %716 = vmatpush1.msra.mxu0 0.0
        %717 = vmatprep.subr.mxu0 0.0
        %718 = vmatpush1.msra.mxu0 0.0
        %719 = vmatprep.subr.mxu0 0.0
        %720 = vmatpush1.msra.mxu0 0.0
        %721 = vmatprep.subr.mxu0 0.0
        %722 = vmatpush1.msra.mxu0 0.0
        %723 = vmatprep.subr.mxu0 0.0
        %724 = vmatpush1.msra.mxu0 0.0
        %725 = vmatprep.subr.mxu0 0.0
        %726 = vmatpush1.msra.mxu0 0.0
        %727 = vmatprep.subr.mxu0 0.0
        %728 = vmatpush1.msra.mxu0 0.0
        %729 = vmatprep.subr.mxu0 0.0
        %730 = vmatpush1.msra.mxu0 0.0
        %731 = vmatprep.subr.mxu0 0.0
        %732 = vmatpush1.msra.mxu0 0.0
        %733 = vmatprep.subr.mxu0 0.0
        %734 = vmatpush1.msra.mxu0 0.0
        %735 = vmatprep.subr.mxu0 0.0
        %736 = vmatpush1.msra.mxu0 0.0
        %737 = vmatprep.subr.mxu0 0.0
        %738 = vmatpush1.msra.mxu0 0.0
        %739 = vmatprep.subr.mxu0 0.0
        %740 = vmatpush1.msra.mxu0 0.0
        %741 = vmatprep.subr.mxu0 0.0
        %742 = vmatpush1.msra.mxu0 0.0
        %743 = vmatprep.subr.mxu0 0.0
        %744 = vmatpush1.msra.mxu0 %v301
        %745 = vmatprep.subr.mxu0 0.0
        %746 = vmatpush1.msra.mxu0 %v300
        %747 = vmatprep.subr.mxu0 0.0
        %748 = vmatpush2.msra.mxu0 0.0
        %749 = vmatprep.subr.mxu0 0.0
        %750 = vmatpush2.msra.mxu0 0.0
        %751 = vmatprep.subr.mxu0 0.0
        %752 = vmatpush2.msra.mxu0 0.0
        %753 = vmatprep.subr.mxu0 0.0
        %754 = vmatpush2.msra.mxu0 0.0
        %755 = vmatprep.subr.mxu0 0.0
        %756 = vmatpush2.msra.mxu0 0.0
        %757 = vmatprep.subr.mxu0 0.0
        %758 = vmatpush2.msra.mxu0 0.0
        %759 = vmatprep.subr.mxu0 0.0
        %760 = vmatpush2.msra.mxu0 0.0
        %761 = vmatprep.subr.mxu0 0.0
        %762 = vmatpush2.msra.mxu0 0.0
        %763 = vmatprep.subr.mxu0 0.0
        %764 = vmatpush2.msra.mxu0 0.0
        %765 = vmatprep.subr.mxu0 0.0
        %766 = vmatpush2.msra.mxu0 0.0
        %767 = vmatprep.subr.mxu0 0.0
        %768 = vmatpush2.msra.mxu0 0.0
        %769 = vmatprep.subr.mxu0 0.0
        %770 = vmatpush2.msra.mxu0 0.0
        %771 = vmatprep.subr.mxu0 0.0
        %772 = vmatpush2.msra.mxu0 0.0
        %773 = vmatprep.subr.mxu0 0.0
        %774 = vmatpush2.msra.mxu0 0.0
        %775 = vmatprep.subr.mxu0 0.0
        %776 = vmatpush2.msra.mxu0 0.0
        %777 = vmatprep.subr.mxu0 0.0
        %778 = vmatpush2.msra.mxu0 0.0
        %779 = vmatprep.mubr.f32.mxu0 0.0
        %780 = vmatmul.mubr.f32.gmra.mxu0 %v713
        %v781 = vpop.f32.mrf.mxu0
        %v782 = vadd.f32 %v709, %v781
        %v783 = vpop.f32.mrf.mxu0
        %784 = vdwg.mxu0
        %785 = vst.msk [vmem:[%s214] sm:$0xff] %vm220, %v782
        %s786 = sand.u32 %s97, 1
        %s787 = scalar_lea.sflag [#allocation4], %s786
        %s788 = sand.u32 %s97, 1
        %s789 = smul.addr %s788, 8
        %s790 = scalar_lea.vmem [#allocation8], %s789
        // Predicated region
        $region45: #{tpu_custom_call.1} parent=31 // pred_check
          %p791 = pneg %p107
        $region46: #{tpu_custom_call.1} parent=31 // pred_check_branch
          %793 = sbr.rel (%p791) target = $region48
        $region47: #{tpu_custom_call.1} parent=31 // pred_region
          %s795 = ssub.s32 128, 128
          %796 = vsyncadd %s787, %s795
          %s797 = smul.addr %s21, 128
          %s798 = scalar_lea.hbm %s3, %s797
          %s800 = sshll.u32 %s790, 4
          %s801 = int_to_ptr.vmem [resolvable:$true] %s800
          %803 = dma.vmem_to_hbm [thread:$0]  %s801, 128, %s798, %s787
        $region48: #{tpu_custom_call.1} parent=31 // pred_fallthru
          _
      $region32: #{tpu_custom_call.1} parent=5 // pred_fallthru
        _
      %p804 = scmp.le.s32.totalorder 2, %s16
      // Predicated region
      $region49: #{tpu_custom_call.1} parent=5 // pred_check
        %p805 = pneg %p804
      $region50: #{tpu_custom_call.1} parent=5 // pred_check_branch
        %807 = sbr.rel (%p805) target = $region52
      $region51: #{tpu_custom_call.1} parent=5 // pred_region
        %s808 = ssub.s32 %s16, 2
        // Predicated region
        $region53: #{tpu_custom_call.1} parent=51 // pred_check
          %p809 = pneg %p113
        $region54: #{tpu_custom_call.1} parent=51 // pred_check_branch
          %811 = sbr.rel (%p809) target = $region56
        $region55: #{tpu_custom_call.1} parent=51 // pred_region
          %s812 = sand.u32 %s98, 1
          %s813 = scalar_lea.sflag [#allocation4], %s812
          %s814 = sand.u32 %s98, 1
          %s815 = smul.addr %s814, 8
          %s816 = scalar_lea.vmem [#allocation8], %s815
          %817 = dma.done %s813, 128
        $region56: #{tpu_custom_call.1} parent=51 // pred_fallthru
          _
      $region52: #{tpu_custom_call.1} parent=5 // pred_fallthru
        _
    $region6: #{tpu_custom_call.1} parent=1 // loop_footer
      %s20 = sadd.s32 1, %s16
    $region7: #{tpu_custom_call.1} parent=1 // loop_footer_branch
      %15 = sbr.rel target = $region3
    $region8: #{tpu_custom_call.1} parent=1 // loop_exit
      _
    %818 = vsyncpa [#allocation3], 1
    %s819 = scalar_lea.sflag [#allocation3], 1
    %820 = vsyncpa %s819, 1
    %821 = vsyncpa [#allocation6], 1
    %822 = vsyncpa [#allocation4], 1
    %s823 = scalar_lea.sflag [#allocation4], 1
    %824 = vsyncpa %s823, 1

</llo_original>
